<compile_context>
chip_gen: v7x
topology: tpu7x:2x2x1
jax: 0.10.0
libtpu: 0.0.40
codegen_flags: <defaults>
</compile_context>

<pallas_src>
import jax
import jax.numpy as jnp
from jax.experimental import pallas as pl
from jax.experimental.pallas import tpu as pltpu


def _round_up(x, m):
    return (x + m - 1) // m * m


def _cdiv(a, b):
    return (a + b - 1) // b


def _classifier_kernel(x_ref, w1_ref, shift_ref, w2_ref, b2_ref, o_ref):
    # x_ref:     (tm, K)  input rows
    # w1_ref:    (K, C)   first Linear, transposed, BN scale folded into cols
    # shift_ref: (1, C)   folded BN shift = beta - mean * gamma / sqrt(var+eps)
    # w2_ref:    (C, N)   second Linear, transposed
    # b2_ref:    (1, N)   second Linear bias
    h = jnp.dot(x_ref[...].astype(w1_ref.dtype), w1_ref[...],
                preferred_element_type=jnp.float32)
    h = jnp.maximum(h + shift_ref[...], 0.0)          # BN shift + ReLU in f32
    # Dropout (p=0.0 default / eval mode) -> identity.
    y = jnp.dot(h.astype(w2_ref.dtype), w2_ref[...],
                preferred_element_type=jnp.float32)
    o_ref[...] = (y + b2_ref[...]).astype(o_ref.dtype)


def pack_classifier_params(w1, gamma, beta, running_mean, running_var, w2, b2,
                           eps=1e-5, matmul_dtype=jnp.bfloat16):
    """One-time packing: fold eval-mode BatchNorm into the first Linear.

    w1: (midplanes, inplanes)  Linear weight (bias=False)
    w2: (ouplanes, midplanes)  Linear weight
    Returns (w1_folded, shift, w2_t, b2_row) ready for `classifier_forward`.
    """
    scale = (gamma / jnp.sqrt(running_var + eps)).astype(jnp.float32)
    shift = (beta - running_mean * scale).astype(jnp.float32)
    w1f = (w1.T.astype(jnp.float32) * scale[None, :]).astype(matmul_dtype)
    w2t = w2.T.astype(matmul_dtype)
    return (w1f, shift.reshape(1, -1), w2t,
            b2.reshape(1, -1).astype(jnp.float32))


def _choose_row_tile(M, K, N):
    # Big row tiles amortize the ~0.35us per-grid-step overhead; skinny heads
    # (few input/output lanes) can afford larger row tiles in VMEM.
    cap = 1024 if (K + N) <= 512 else 512
    if M <= cap:
        if M > 16:
            # Keep >=2 grid steps so both v7x TensorCores get work.
            return _round_up(_cdiv(M, 2), 8)
        # Single block covering the whole (small) row range; block dim equal
        # to the full array dim is always legal, even if not a multiple of 8.
        return max(M, 1)
    return cap


def classifier_forward(x, packed_params):
    """Fused Classifier forward (eval mode). x: (..., inplanes)."""
    w1f, shift, w2t, b2 = packed_params
    K = x.shape[-1]
    C = w1f.shape[1]
    N = w2t.shape[1]
    assert w1f.shape[0] == K and w2t.shape[0] == C

    x2 = x.reshape(-1, K)
    M = x2.shape[0]
    tm = _choose_row_tile(M, K, N)
    grid = (_cdiv(M, tm),)

    # Explicit VMEM budget from the actual tile sizes (x/out double-buffered,
    # weight slabs resident, f32 hidden), clamped to [32, 64] MiB so it is a
    # valid scoped limit on every generation.
    wbytes = jnp.dtype(w1f.dtype).itemsize
    need = (2 * tm * K * x.dtype.itemsize
            + 2 * tm * N * x.dtype.itemsize
            + 2 * (K * C + C * N) * wbytes
            + 2 * (C + N) * 4
            + 4 * tm * C)
    vmem_limit = int(min(64 * 2 ** 20, max(32 * 2 ** 20, 2 * need)))

    # TODO(synk): very large heads (K*C or C*N weight slabs > ~1/4 of VMEM)
    # would need an extra reduction grid axis + f32 accumulator; not needed
    # for classifier-head sized problems.
    out = pl.pallas_call(
        _classifier_kernel,
        out_shape=jax.ShapeDtypeStruct((M, N), x.dtype),
        grid=grid,
        in_specs=[
            pl.BlockSpec((tm, K), lambda i: (i, 0)),   # x rows (partial last block OK)
            pl.BlockSpec((K, C), lambda i: (0, 0)),    # W1 (BN-folded), resident
            pl.BlockSpec((1, C), lambda i: (0, 0)),    # BN shift
            pl.BlockSpec((C, N), lambda i: (0, 0)),    # W2, resident
            pl.BlockSpec((1, N), lambda i: (0, 0)),    # bias of second Linear
        ],
        out_specs=pl.BlockSpec((tm, N), lambda i: (i, 0)),
        compiler_params=pltpu.CompilerParams(
            dimension_semantics=("parallel",),
            vmem_limit_bytes=vmem_limit),
    )(x2, w1f, shift, w2t, b2)

    return out.reshape(*x.shape[:-1], N)


def reference_classifier(x, w1, gamma, beta, running_mean, running_var, w2, b2,
                         eps=1e-5):
    """Pure-JAX reference mirroring the PyTorch eval-mode forward."""
    h = x @ w1.T
    h = (h - running_mean) / jnp.sqrt(running_var + eps) * gamma + beta
    h = jnp.maximum(h, 0.0)
    return h @ w2.T + b2


if __name__ == "__main__":
    # Small shapes consistent with the module: Classifier(inplanes=32, ouplanes=16)
    inplanes, ouplanes = 32, 16
    hidreduce = 1
    midplanes = inplanes // hidreduce   # 32
    B = 4

    key = jax.random.PRNGKey(0)
    kx, k1, k2, kb, kg, kbe, km, kv = jax.random.split(key, 8)
    x = jax.random.normal(kx, (B, inplanes), dtype=jnp.float32)
    w1 = jax.random.normal(k1, (midplanes, inplanes), dtype=jnp.float32) * 0.1
    w2 = jax.random.normal(k2, (ouplanes, midplanes), dtype=jnp.float32) * 0.1
    b2 = jax.random.normal(kb, (ouplanes,), dtype=jnp.float32) * 0.1
    gamma = 1.0 + 0.1 * jax.random.normal(kg, (midplanes,), dtype=jnp.float32)
    beta = 0.1 * jax.random.normal(kbe, (midplanes,), dtype=jnp.float32)
    running_mean = 0.1 * jax.random.normal(km, (midplanes,), dtype=jnp.float32)
    running_var = jax.random.uniform(kv, (midplanes,), dtype=jnp.float32,
                                     minval=0.5, maxval=1.5)

    bn_args = (gamma, beta, running_mean, running_var)
    ref = reference_classifier(x, w1, *bn_args, w2, b2)

    # f32 matmul path: tight tolerance vs the reference.
    packed_f32 = pack_classifier_params(w1, *bn_args, w2, b2,
                                        matmul_dtype=jnp.float32)
    out_f32 = jax.block_until_ready(classifier_forward(x, packed_f32))
    assert out_f32.shape == (B, ouplanes)
    assert jnp.allclose(out_f32, ref, atol=1e-4, rtol=1e-4)

    # bf16 matmul path (default; MXU-native on v6e/v7x): looser tolerance.
    packed_bf16 = pack_classifier_params(w1, *bn_args, w2, b2)
    out_bf16 = jax.block_until_ready(classifier_forward(x, packed_bf16))
    assert out_bf16.shape == (B, ouplanes)
    assert jnp.allclose(out_bf16, ref, atol=5e-2, rtol=5e-2)

    # Multi-dim batch (leading dims flattened, full-dim row block, no padding).
    x3 = jax.random.normal(k2, (2, 5, inplanes), dtype=jnp.float32)
    out3 = jax.block_until_ready(classifier_forward(x3, packed_f32))
    ref3 = reference_classifier(x3, w1, *bn_args, w2, b2)
    assert out3.shape == (2, 5, ouplanes)
    assert jnp.allclose(out3, ref3, atol=1e-4, rtol=1e-4)

    # Mid-size batch: 2 grid steps with a partial last row block (20 rows, tm=16).
    x4 = jax.random.normal(kb, (20, inplanes), dtype=jnp.float32)
    out4 = jax.block_until_ready(classifier_forward(x4, packed_f32))
    ref4 = reference_classifier(x4, w1, *bn_args, w2, b2)
    assert out4.shape == (20, ouplanes)
    assert jnp.allclose(out4, ref4, atol=1e-4, rtol=1e-4)

    print("KERNEL_OK")
</pallas_src>

<mosaic_0001>
module attributes {stable_mosaic.version = 11 : i64} {
  func.func @_classifier_kernel(%arg0: i32, %arg1: memref<4x32xf32, #tpu.memory_space<vmem>>, %arg2: memref<32x32xf32, #tpu.memory_space<vmem>>, %arg3: memref<1x32xf32, #tpu.memory_space<vmem>>, %arg4: memref<32x16xf32, #tpu.memory_space<vmem>>, %arg5: memref<1x16xf32, #tpu.memory_space<vmem>>, %arg6: memref<4x16xf32, #tpu.memory_space<vmem>>) attributes {dimension_semantics = [#tpu.dimension_semantics<parallel>], iteration_bounds = array<i64: 1>, scalar_prefetch = 0 : i64, scratch_operands = 0 : i64, tpu.core_type = #tpu.core_type<tc>, window_params = [{transform_indices = @transform_0, window_bounds = array<i64: 4, 32>}, {pipeline_mode = #tpu.pipeline_mode<synchronous>, transform_indices = @transform_1, window_bounds = array<i64: 32, 32>}, {pipeline_mode = #tpu.pipeline_mode<synchronous>, transform_indices = @transform_2, window_bounds = array<i64: 1, 32>}, {pipeline_mode = #tpu.pipeline_mode<synchronous>, transform_indices = @transform_3, window_bounds = array<i64: 32, 16>}, {pipeline_mode = #tpu.pipeline_mode<synchronous>, transform_indices = @transform_4, window_bounds = array<i64: 1, 16>}, {transform_indices = @transform_5, window_bounds = array<i64: 4, 16>}]} {
    %c0 = arith.constant 0 : index
    %c0_0 = arith.constant 0 : index
    %0 = vector.load %arg1[%c0, %c0_0] : memref<4x32xf32, #tpu.memory_space<vmem>>, vector<4x32xf32>
    %c0_1 = arith.constant 0 : index
    %c0_2 = arith.constant 0 : index
    %1 = vector.load %arg2[%c0_1, %c0_2] : memref<32x32xf32, #tpu.memory_space<vmem>>, vector<32x32xf32>
    %cst = arith.constant dense<0.000000e+00> : vector<4x32xf32>
    %2 = tpu.matmul %0, %1, %cst {dimension_numbers = #tpu.dot_dimension_numbers<[1], [0], [0], [1], [0, 0, 1, 1], [], []>} : vector<4x32xf32>, vector<32x32xf32>, vector<4x32xf32> -> vector<4x32xf32>
    %c0_3 = arith.constant 0 : index
    %c0_4 = arith.constant 0 : index
    %3 = vector.load %arg3[%c0_3, %c0_4] : memref<1x32xf32, #tpu.memory_space<vmem>>, vector<1x32xf32>
    %4 = vector.broadcast %3 : vector<1x32xf32> to vector<4x32xf32>
    %5 = arith.addf %2, %4 : vector<4x32xf32>
    %cst_5 = arith.constant 0.000000e+00 : f32
    %6 = vector.broadcast %cst_5 : f32 to vector<4x32xf32>
    %7 = arith.maximumf %5, %6 : vector<4x32xf32>
    %c0_6 = arith.constant 0 : index
    %c0_7 = arith.constant 0 : index
    %8 = vector.load %arg4[%c0_6, %c0_7] : memref<32x16xf32, #tpu.memory_space<vmem>>, vector<32x16xf32>
    %cst_8 = arith.constant dense<0.000000e+00> : vector<4x16xf32>
    %9 = tpu.matmul %7, %8, %cst_8 {dimension_numbers = #tpu.dot_dimension_numbers<[1], [0], [0], [1], [0, 0, 1, 1], [], []>} : vector<4x32xf32>, vector<32x16xf32>, vector<4x16xf32> -> vector<4x16xf32>
    %c0_9 = arith.constant 0 : index
    %c0_10 = arith.constant 0 : index
    %10 = vector.load %arg5[%c0_9, %c0_10] : memref<1x16xf32, #tpu.memory_space<vmem>>, vector<1x16xf32>
    %11 = vector.broadcast %10 : vector<1x16xf32> to vector<4x16xf32>
    %12 = arith.addf %9, %11 : vector<4x16xf32>
    %c0_11 = arith.constant 0 : index
    %c0_12 = arith.constant 0 : index
    %13 = vector.load %arg6[%c0_11, %c0_12] : memref<4x16xf32, #tpu.memory_space<vmem>>, vector<4x16xf32>
    tpu.vector_store %arg6[%c0_11, %c0_12], %12 {strides = array<i32>} : memref<4x16xf32, #tpu.memory_space<vmem>>, vector<4x16xf32>,
    return
  }
  func.func @transform_0(%arg0: i32) -> (i32, i32) {
    %c0_i32 = arith.constant 0 : i32
    %c0_i32_0 = arith.constant 0 : i32
    return %arg0, %c0_i32 : i32, i32
  }
  func.func @transform_1(%arg0: i32) -> (i32, i32) {
    %c0_i32 = arith.constant 0 : i32
    %c0_i32_0 = arith.constant 0 : i32
    %c0_i32_1 = arith.constant 0 : i32
    return %c0_i32, %c0_i32_0 : i32, i32
  }
  func.func @transform_2(%arg0: i32) -> (i32, i32) {
    %c0_i32 = arith.constant 0 : i32
    %c0_i32_0 = arith.constant 0 : i32
    %c0_i32_1 = arith.constant 0 : i32
    return %c0_i32, %c0_i32_0 : i32, i32
  }
  func.func @transform_3(%arg0: i32) -> (i32, i32) {
    %c0_i32 = arith.constant 0 : i32
    %c0_i32_0 = arith.constant 0 : i32
    %c0_i32_1 = arith.constant 0 : i32
    return %c0_i32, %c0_i32_0 : i32, i32
  }
  func.func @transform_4(%arg0: i32) -> (i32, i32) {
    %c0_i32 = arith.constant 0 : i32
    %c0_i32_0 = arith.constant 0 : i32
    %c0_i32_1 = arith.constant 0 : i32
    return %c0_i32, %c0_i32_0 : i32, i32
  }
  func.func @transform_5(%arg0: i32) -> (i32, i32) {
    %c0_i32 = arith.constant 0 : i32
    %c0_i32_0 = arith.constant 0 : i32
    return %arg0, %c0_i32 : i32, i32
  }
}

</mosaic_0001>

<llo_original>
// kernel: tpu_custom_call.1
$region0: #{tpu_custom_call.1}
  #allocation0 [shape = 'u32[]', space=smem, size = 0x4, offset = 0x4, fixed_abs, tag = 'smem constant byte address 0x4 - core index']
  #allocation1 [shape = 'u32[144,128]{1,0:T(1,128)}', space=vmem, size = 0x12000, scoped, tag = 'internal scratch']
  %s0 = inlined_call_operand.vmem [shape: f32[4,32], index: 0, kind: input, shape index: {}]
  %s1 = inlined_call_operand.vmem [shape: f32[32,32], index: 1, kind: input, shape index: {}]
  %s2 = inlined_call_operand.vmem [shape: f32[1,32], index: 2, kind: input, shape index: {}]
  %s3 = inlined_call_operand.vmem [shape: f32[32,16], index: 3, kind: input, shape index: {}]
  %s4 = inlined_call_operand.vmem [shape: f32[1,16], index: 4, kind: input, shape index: {}]
  %s5 = inlined_call_operand.hbm [shape: f32[4,16], index: 5, kind: output, shape index: {}]
  %s6 = sld [smem:[#allocation0]]
  $region30: #{tpu_custom_call.1} parent=0
    _
  %s8 = ssub.s32 1, %s6
  %s9 = scalar_select 0, %s8, %s6
  $region1: #{tpu_custom_call.1} parent=0
    #allocation2 [shape = 'u8[2048]{0}', space=vmem, size = 0x800, scoped, tag = 'output window, operand 0, single buffered']
    #allocation3 [shape = 's32[1]{0}', space=sflag, size = 0x4, scoped, tag = 'scoped memory for tpu_custom_call.1']
    %10 = vsyncpa [#allocation3], 0
    // Predicated region
    $region2: #{tpu_custom_call.1} parent=1 // pred_check
      _
    $region3: #{tpu_custom_call.1} parent=1 // pred_check_branch
      %12 = sbr.rel (0) target = $region5
    $region4: #{tpu_custom_call.1} parent=1 // pred_region
      _
    $region5: #{tpu_custom_call.1} parent=1 // pred_fallthru
      _
    // Predicated region
    $region6: #{tpu_custom_call.1} parent=1 // pred_check
      _
    $region7: #{tpu_custom_call.1} parent=1 // pred_check_branch
      %14 = sbr.rel (0) target = $region9
    $region8: #{tpu_custom_call.1} parent=1 // pred_region
      _
    $region9: #{tpu_custom_call.1} parent=1 // pred_fallthru
      _
    // Predicated region
    $region10: #{tpu_custom_call.1} parent=1 // pred_check
      _
    $region11: #{tpu_custom_call.1} parent=1 // pred_check_branch
      %16 = sbr.rel (0) target = $region13
    $region12: #{tpu_custom_call.1} parent=1 // pred_region
      _
    $region13: #{tpu_custom_call.1} parent=1 // pred_fallthru
      _
    // Predicated region
    $region14: #{tpu_custom_call.1} parent=1 // pred_check
      _
    $region15: #{tpu_custom_call.1} parent=1 // pred_check_branch
      %18 = sbr.rel (0) target = $region17
    $region16: #{tpu_custom_call.1} parent=1 // pred_region
      _
    $region17: #{tpu_custom_call.1} parent=1 // pred_fallthru
      _
    // Predicated region
    $region18: #{tpu_custom_call.1} parent=1 // pred_check
      _
    $region19: #{tpu_custom_call.1} parent=1 // pred_check_branch
      %20 = sbr.rel (0) target = $region21
    $region20: #{tpu_custom_call.1} parent=1 // pred_region
      _
    $region21: #{tpu_custom_call.1} parent=1 // pred_fallthru
      _
    %v21 = vld [vmem:[%s0] sm:$0xf]
    %v22 = vld [vmem:[%s1] sm:$0xff]
    %v23 = vld [vmem:[%s1 + $0x8] sm:$0xff]
    %v24 = vld [vmem:[%s1 + $0x10] sm:$0xff]
    %v25 = vld [vmem:[%s1 + $0x18] sm:$0xff]
    %v26 = vld [vmem:[%s2] sm:$0x1]
    %v28 = vlaneseq
    %v29 = vshrl.u32 %v28, 7
    %v30 = vsub.s32 0, %v29
    %v31 = vrot.slane %v26, %v30
    %vm33 = vcmask 261120
    %v35 = vsel %vm33, %v21, 0
    %37 = vmatprep.subr.mxu0 0.0
    %38 = vmatpush1.msra.mxu0 %v22
    %39 = vmatprep.subr.mxu0 0.0
    %40 = vmatpush1.msra.mxu0 %v23
    %41 = vmatprep.subr.mxu0 0.0
    %42 = vmatpush1.msra.mxu0 %v24
    %43 = vmatprep.subr.mxu0 0.0
    %44 = vmatpush1.msra.mxu0 %v25
    %45 = vmatprep.subr.mxu0 0.0
    %46 = vmatpush1.msra.mxu0 0.0
    %47 = vmatprep.subr.mxu0 0.0
    %48 = vmatpush1.msra.mxu0 0.0
    %49 = vmatprep.subr.mxu0 0.0
    %50 = vmatpush1.msra.mxu0 0.0
    %51 = vmatprep.subr.mxu0 0.0
    %52 = vmatpush1.msra.mxu0 0.0
    %53 = vmatprep.subr.mxu0 0.0
    %54 = vmatpush1.msra.mxu0 0.0
    %55 = vmatprep.subr.mxu0 0.0
    %56 = vmatpush1.msra.mxu0 0.0
    %57 = vmatprep.subr.mxu0 0.0
    %58 = vmatpush1.msra.mxu0 0.0
    %59 = vmatprep.subr.mxu0 0.0
    %60 = vmatpush1.msra.mxu0 0.0
    %61 = vmatprep.subr.mxu0 0.0
    %62 = vmatpush1.msra.mxu0 0.0
    %63 = vmatprep.subr.mxu0 0.0
    %64 = vmatpush1.msra.mxu0 0.0
    %65 = vmatprep.subr.mxu0 0.0
    %66 = vmatpush1.msra.mxu0 0.0
    %67 = vmatprep.subr.mxu0 0.0
    %68 = vmatpush1.msra.mxu0 0.0
    %69 = vmatprep.subr.mxu0 0.0
    %70 = vmatpush1.msra.mxu0 0.0
    %71 = vmatprep.subr.mxu0 0.0
    %72 = vmatpush1.msra.mxu0 0.0
    %73 = vmatprep.subr.mxu0 0.0
    %74 = vmatpush1.msra.mxu0 0.0
    %75 = vmatprep.subr.mxu0 0.0
    %76 = vmatpush1.msra.mxu0 0.0
    %77 = vmatprep.subr.mxu0 0.0
    %78 = vmatpush1.msra.mxu0 0.0
    %79 = vmatprep.subr.mxu0 0.0
    %80 = vmatpush1.msra.mxu0 0.0
    %81 = vmatprep.subr.mxu0 0.0
    %82 = vmatpush1.msra.mxu0 0.0
    %83 = vmatprep.subr.mxu0 0.0
    %84 = vmatpush1.msra.mxu0 0.0
    %85 = vmatprep.subr.mxu0 0.0
    %86 = vmatpush1.msra.mxu0 0.0
    %87 = vmatprep.subr.mxu0 0.0
    %88 = vmatpush1.msra.mxu0 0.0
    %89 = vmatprep.subr.mxu0 0.0
    %90 = vmatpush1.msra.mxu0 0.0
    %91 = vmatprep.subr.mxu0 0.0
    %92 = vmatpush1.msra.mxu0 0.0
    %93 = vmatprep.subr.mxu0 0.0
    %94 = vmatpush1.msra.mxu0 0.0
    %95 = vmatprep.subr.mxu0 0.0
    %96 = vmatpush1.msra.mxu0 0.0
    %97 = vmatprep.subr.mxu0 0.0
    %98 = vmatpush1.msra.mxu0 0.0
    %99 = vmatprep.subr.mxu0 0.0
    %100 = vmatpush1.msra.mxu0 0.0
    %101 = vmatprep.mubr.f32.mxu0 0.0
    %102 = vmatmul.mubr.f32.gmra.mrb[0].mxu0 %v35
    %v103 = vpop.f32.mrb[0].mxu0
    %v104 = vadd.f32 %v31, %v103
    %v105 = vpop.f32.mrb[0].mxu0
    %106 = vdwg.mxu0
    %v107 = vmax.f32 %v104, 0.0
    %v108 = vld [vmem:[%s3] sm:$0xff]
    %v109 = vld [vmem:[%s3 + $0x8] sm:$0xff]
    %v110 = vld [vmem:[%s3 + $0x10] sm:$0xff]
    %v111 = vld [vmem:[%s3 + $0x18] sm:$0xff]
    %v112 = vld [vmem:[%s4] sm:$0x1]
    %v114 = vlaneseq
    %v115 = vshrl.u32 %v114, 7
    %v116 = vsub.s32 0, %v115
    %v117 = vrot.slane %v112, %v116
    %v120 = vsel %vm33, %v107, 0
    %122 = vmatprep.subr.mxu0 0.0
    %123 = vmatpush1.msra.mxu0 %v108
    %124 = vmatprep.subr.mxu0 0.0
    %125 = vmatpush1.msra.mxu0 %v109
    %126 = vmatprep.subr.mxu0 0.0
    %127 = vmatpush1.msra.mxu0 %v110
    %128 = vmatprep.subr.mxu0 0.0
    %129 = vmatpush1.msra.mxu0 %v111
    %130 = vmatprep.subr.mxu0 0.0
    %131 = vmatpush1.msra.mxu0 0.0
    %132 = vmatprep.subr.mxu0 0.0
    %133 = vmatpush1.msra.mxu0 0.0
    %134 = vmatprep.subr.mxu0 0.0
    %135 = vmatpush1.msra.mxu0 0.0
    %136 = vmatprep.subr.mxu0 0.0
    %137 = vmatpush1.msra.mxu0 0.0
    %138 = vmatprep.subr.mxu0 0.0
    %139 = vmatpush1.msra.mxu0 0.0
    %140 = vmatprep.subr.mxu0 0.0
    %141 = vmatpush1.msra.mxu0 0.0
    %142 = vmatprep.subr.mxu0 0.0
    %143 = vmatpush1.msra.mxu0 0.0
    %144 = vmatprep.subr.mxu0 0.0
    %145 = vmatpush1.msra.mxu0 0.0
    %146 = vmatprep.subr.mxu0 0.0
    %147 = vmatpush1.msra.mxu0 0.0
    %148 = vmatprep.subr.mxu0 0.0
    %149 = vmatpush1.msra.mxu0 0.0
    %150 = vmatprep.subr.mxu0 0.0
    %151 = vmatpush1.msra.mxu0 0.0
    %152 = vmatprep.subr.mxu0 0.0
    %153 = vmatpush1.msra.mxu0 0.0
    %154 = vmatprep.subr.mxu0 0.0
    %155 = vmatpush1.msra.mxu0 0.0
    %156 = vmatprep.subr.mxu0 0.0
    %157 = vmatpush1.msra.mxu0 0.0
    %158 = vmatprep.subr.mxu0 0.0
    %159 = vmatpush1.msra.mxu0 0.0
    %160 = vmatprep.subr.mxu0 0.0
    %161 = vmatpush1.msra.mxu0 0.0
    %162 = vmatprep.subr.mxu0 0.0
    %163 = vmatpush1.msra.mxu0 0.0
    %164 = vmatprep.subr.mxu0 0.0
    %165 = vmatpush1.msra.mxu0 0.0
    %166 = vmatprep.subr.mxu0 0.0
    %167 = vmatpush1.msra.mxu0 0.0
    %168 = vmatprep.subr.mxu0 0.0
    %169 = vmatpush1.msra.mxu0 0.0
    %170 = vmatprep.subr.mxu0 0.0
    %171 = vmatpush1.msra.mxu0 0.0
    %172 = vmatprep.subr.mxu0 0.0
    %173 = vmatpush1.msra.mxu0 0.0
    %174 = vmatprep.subr.mxu0 0.0
    %175 = vmatpush1.msra.mxu0 0.0
    %176 = vmatprep.subr.mxu0 0.0
    %177 = vmatpush1.msra.mxu0 0.0
    %178 = vmatprep.subr.mxu0 0.0
    %179 = vmatpush1.msra.mxu0 0.0
    %180 = vmatprep.subr.mxu0 0.0
    %181 = vmatpush1.msra.mxu0 0.0
    %182 = vmatprep.subr.mxu0 0.0
    %183 = vmatpush1.msra.mxu0 0.0
    %184 = vmatprep.subr.mxu0 0.0
    %185 = vmatpush1.msra.mxu0 0.0
    %186 = vmatprep.mubr.f32.mxu0 0.0
    %187 = vmatmul.mubr.f32.gmra.mrb[0].mxu0 %v120
    %v188 = vpop.f32.mrb[0].mxu0
    %v189 = vadd.f32 %v117, %v188
    %v190 = vpop.f32.mrb[0].mxu0
    %191 = vdwg.mxu0
    %vm192 = vcmask 125952
    %193 = vst.msk [vmem:[#allocation2] sm:$0xf] %vm192, %v189
    // Predicated region
    $region22: #{tpu_custom_call.1} parent=1 // pred_check
      _
    $region23: #{tpu_custom_call.1} parent=1 // pred_check_branch
      %195 = sbr.rel (0) target = $region25
    $region24: #{tpu_custom_call.1} parent=1 // pred_region
      %s197 = ssub.s32 64, 64
      %198 = vsyncadd [#allocation3], %s197
      %s200 = sshll.u32 [#allocation2], 4
      %s201 = int_to_ptr.vmem [resolvable:$true] %s200
      %203 = dma.vmem_to_hbm [thread:$0]  %s201, 64, %s5, [#allocation3]
    $region25: #{tpu_custom_call.1} parent=1 // pred_fallthru
      _
    // Predicated region
    $region26: #{tpu_custom_call.1} parent=1 // pred_check
      _
    $region27: #{tpu_custom_call.1} parent=1 // pred_check_branch
      %205 = sbr.rel (0) target = $region29
    $region28: #{tpu_custom_call.1} parent=1 // pred_region
      %206 = dma.done [#allocation3], 64
    $region29: #{tpu_custom_call.1} parent=1 // pred_fallthru
      _
    %207 = vsyncpa [#allocation3], 1

</llo_original>
